<compile_context>
chip_gen: v7x
topology: tpu7x:2x2x1
jax: 0.10.0
libtpu: 0.0.40
codegen_flags: <defaults>
</compile_context>

<pallas_src>
import jax
import jax.numpy as jnp
from jax.experimental import pallas as pl
from jax.experimental.pallas import tpu as pltpu


# ------------------------------ Pallas kernel -------------------------------
def _se_kernel(x_ref, w1t_ref, b1_ref, w2t_ref, b2_ref, out_ref):
    # x_ref  : (TB, C, HW)  TB images, channel-major, spatial last (lane axis)
    # w1t_ref: (C, Cr)      fc1 weight, pre-transposed (f32)
    # b1_ref : (1, Cr)      fc1 bias
    # w2t_ref: (Cr, C)      fc2 weight, pre-transposed (f32)
    # b2_ref : (1, C)       fc2 bias
    # out_ref: (TB, C, HW)
    hw = x_ref.shape[-1]

    # Squeeze: per-(image, channel) spatial mean, accumulated in f32 directly
    # from the ref -- no full-tile f32 temporary is materialized.
    squeeze = jnp.sum(x_ref[...], axis=-1, dtype=jnp.float32) * (1.0 / hw)  # (TB, C)

    # Excitation: two tiny FCs + ReLU + sigmoid, all in f32.  Kernel is
    # HBM-bound; batching TB images per step gives M=TB instead of M=1.
    h = jnp.dot(squeeze, w1t_ref[...], preferred_element_type=jnp.float32)
    h = jnp.maximum(h + b1_ref[...], 0.0)                                   # (TB, Cr)
    s = jnp.dot(h, w2t_ref[...], preferred_element_type=jnp.float32)
    scale = jax.nn.sigmoid(s + b2_ref[...])                                 # (TB, C)

    # Rescale in the input's native dtype (lane-broadcast of the per-channel
    # scale over the spatial axis); no f32 copy of the tile is kept alive.
    out_ref[...] = (x_ref[...] * scale.astype(x_ref.dtype)[:, :, None]).astype(
        out_ref.dtype)


# ------------------------------- host wrapper --------------------------------
_VMEM_DATA_BUDGET = 24 << 20  # bytes budgeted for the 2x(in)+2x(out) blocks


def _round_up(v, m):
    return -(-v // m) * m


def _choose_tb(B, C, HW, itemsize):
    """Images per grid step, sized against VMEM with lane/sublane padding."""
    hw_pad = _round_up(HW, 128)              # lanes pad to 128
    sub = 32 // itemsize                      # sublane packing: 8 f32, 16 bf16
    c_pad = _round_up(C, sub)
    per_image = c_pad * hw_pad * itemsize
    tb = max(1, _VMEM_DATA_BUDGET // (4 * per_image))   # 4x: dbl-buffered in+out
    tb = min(tb, B)
    if B >= 2:
        tb = max(1, min(tb, B // 2))          # keep >= 2 grid steps (megacore)
    while B % tb:                             # exact divisor => no padded blocks
        tb -= 1
    return tb, per_image


def channel_se_layer(x_nchw, w1, b1, w2, b2, *, donate_input=False):
    B, C, H, W = x_nchw.shape
    HW = H * W
    Cr = w1.shape[0]
    dtype = x_nchw.dtype
    itemsize = jnp.dtype(dtype).itemsize

    x = x_nchw.reshape(B, C, HW)              # pure reshape, NCHW order kept
    w1t = jnp.asarray(w1, jnp.float32).T       # (C, Cr)
    w2t = jnp.asarray(w2, jnp.float32).T       # (Cr, C)
    b1r = jnp.asarray(b1, jnp.float32).reshape(1, Cr)
    b2r = jnp.asarray(b2, jnp.float32).reshape(1, C)

    tb, per_image = _choose_tb(B, C, HW, itemsize)
    grid = (pl.cdiv(B, tb),)

    weight_bytes = 4 * (2 * C * Cr + C + Cr)
    vmem_limit = int(min(max(4 * tb * per_image + 2 * weight_bytes + (4 << 20),
                             32 << 20), 128 << 20))

    cost = pl.CostEstimate(
        flops=int(2 * B * C * HW + 4 * B * C * Cr),
        transcendentals=int(B * C),
        bytes_accessed=int(2 * B * C * HW * itemsize + weight_bytes),
    )

    out = pl.pallas_call(
        _se_kernel,
        out_shape=jax.ShapeDtypeStruct((B, C, HW), dtype),
        grid=grid,
        in_specs=[
            pl.BlockSpec((tb, C, HW), lambda b: (b, 0, 0)),
            pl.BlockSpec((C, Cr), lambda b: (0, 0)),
            pl.BlockSpec((1, Cr), lambda b: (0, 0)),
            pl.BlockSpec((Cr, C), lambda b: (0, 0)),
            pl.BlockSpec((1, C), lambda b: (0, 0)),
        ],
        out_specs=pl.BlockSpec((tb, C, HW), lambda b: (b, 0, 0)),
        compiler_params=pltpu.CompilerParams(
            dimension_semantics=("parallel",),
            vmem_limit_bytes=vmem_limit,
        ),
        cost_estimate=cost,
        input_output_aliases=({0: 0} if donate_input else {}),
    )(x, w1t, b1r, w2t, b2r)
    return out.reshape(B, C, H, W)


channel_se_layer_jit = jax.jit(channel_se_layer, static_argnames=("donate_input",))


# --------------------------- pure-JAX reference ------------------------------
def se_ref(x, w1, b1, w2, b2):
    B, C, H, W = x.shape
    squeeze = x.reshape(B, C, -1).mean(axis=2).astype(jnp.float32)   # (B, C)
    h = jax.nn.relu(squeeze @ w1.T + b1)                             # (B, Cr)
    s = jax.nn.sigmoid(h @ w2.T + b2)                                # (B, C)
    return x * s[:, :, None, None]


# ----------------------------------- main ------------------------------------
if __name__ == "__main__":
    # reduction_ratio=16 (PyTorch default) -> C=32 gives Cr=2.
    # H=W=14 (HW=196, NOT a multiple of 128) exercises the lane-padding path.
    B, C, H, W = 4, 32, 14, 14
    reduction = 16
    Cr = C // reduction

    key = jax.random.PRNGKey(0)
    kx, k1, k2, k3, k4 = jax.random.split(key, 5)
    x = jax.random.normal(kx, (B, C, H, W), jnp.float32)

    # nn.Linear default init: U(-1/sqrt(fan_in), 1/sqrt(fan_in)).
    bound1 = 1.0 / (C ** 0.5)
    w1 = jax.random.uniform(k1, (Cr, C), jnp.float32, -bound1, bound1)
    b1 = jax.random.uniform(k2, (Cr,), jnp.float32, -bound1, bound1)
    bound2 = 1.0 / (Cr ** 0.5)
    w2 = jax.random.uniform(k3, (C, Cr), jnp.float32, -bound2, bound2)
    b2 = jax.random.uniform(k4, (C,), jnp.float32, -bound2, bound2)

    ref = se_ref(x, w1, b1, w2, b2)

    # f32 activations.
    out = jax.block_until_ready(channel_se_layer_jit(x, w1, b1, w2, b2))
    err = float(jnp.max(jnp.abs(out - ref)))
    assert jnp.allclose(out, ref, rtol=1e-4, atol=1e-4), f"f32 max_err={err}"

    # bf16 activations (same kernel; excitation stays f32, rescale in bf16).
    xb = x.astype(jnp.bfloat16)
    outb = jax.block_until_ready(channel_se_layer_jit(xb, w1, b1, w2, b2))
    errb = float(jnp.max(jnp.abs(outb.astype(jnp.float32) - ref)))
    assert errb < 5e-2, f"bf16 max_err={errb}"

    print("KERNEL_OK")
</pallas_src>

<mosaic_0001>
module attributes {stable_mosaic.version = 11 : i64} {
  func.func @_se_kernel(%arg0: i32, %arg1: memref<2x32x196xf32, #tpu.memory_space<vmem>>, %arg2: memref<32x2xf32, #tpu.memory_space<vmem>>, %arg3: memref<1x2xf32, #tpu.memory_space<vmem>>, %arg4: memref<2x32xf32, #tpu.memory_space<vmem>>, %arg5: memref<1x32xf32, #tpu.memory_space<vmem>>, %arg6: memref<2x32x196xf32, #tpu.memory_space<vmem>>) attributes {dimension_semantics = [#tpu.dimension_semantics<parallel>], iteration_bounds = array<i64: 2>, scalar_prefetch = 0 : i64, scratch_operands = 0 : i64, tpu.core_type = #tpu.core_type<tc>, window_params = [{transform_indices = @transform_0, window_bounds = array<i64: 2, 32, 196>}, {pipeline_mode = #tpu.pipeline_mode<synchronous>, transform_indices = @transform_1, window_bounds = array<i64: 32, 2>}, {pipeline_mode = #tpu.pipeline_mode<synchronous>, transform_indices = @transform_2, window_bounds = array<i64: 1, 2>}, {pipeline_mode = #tpu.pipeline_mode<synchronous>, transform_indices = @transform_3, window_bounds = array<i64: 2, 32>}, {pipeline_mode = #tpu.pipeline_mode<synchronous>, transform_indices = @transform_4, window_bounds = array<i64: 1, 32>}, {transform_indices = @transform_5, window_bounds = array<i64: 2, 32, 196>}]} {
    %c0 = arith.constant 0 : index
    %c0_0 = arith.constant 0 : index
    %c0_1 = arith.constant 0 : index
    %0 = vector.load %arg1[%c0, %c0_0, %c0_1] : memref<2x32x196xf32, #tpu.memory_space<vmem>>, vector<2x32x196xf32>
    %cst = arith.constant dense<0.000000e+00> : vector<2x32xf32>
    %1 = vector.multi_reduction <add>, %0, %cst [2] : vector<2x32x196xf32> to vector<2x32xf32>
    %cst_2 = arith.constant 0.00510204071 : f32
    %2 = vector.broadcast %cst_2 : f32 to vector<2x32xf32>
    %3 = arith.mulf %1, %2 : vector<2x32xf32>
    %c0_3 = arith.constant 0 : index
    %c0_4 = arith.constant 0 : index
    %4 = vector.load %arg2[%c0_3, %c0_4] : memref<32x2xf32, #tpu.memory_space<vmem>>, vector<32x2xf32>
    %cst_5 = arith.constant dense<0.000000e+00> : vector<2x2xf32>
    %5 = tpu.matmul %3, %4, %cst_5 {dimension_numbers = #tpu.dot_dimension_numbers<[1], [0], [0], [1], [0, 0, 1, 1], [], []>} : vector<2x32xf32>, vector<32x2xf32>, vector<2x2xf32> -> vector<2x2xf32>
    %c0_6 = arith.constant 0 : index
    %c0_7 = arith.constant 0 : index
    %6 = vector.load %arg3[%c0_6, %c0_7] : memref<1x2xf32, #tpu.memory_space<vmem>>, vector<1x2xf32>
    %7 = vector.broadcast %6 : vector<1x2xf32> to vector<2x2xf32>
    %8 = arith.addf %5, %7 : vector<2x2xf32>
    %cst_8 = arith.constant 0.000000e+00 : f32
    %9 = vector.broadcast %cst_8 : f32 to vector<2x2xf32>
    %10 = arith.maximumf %8, %9 : vector<2x2xf32>
    %c0_9 = arith.constant 0 : index
    %c0_10 = arith.constant 0 : index
    %11 = vector.load %arg4[%c0_9, %c0_10] : memref<2x32xf32, #tpu.memory_space<vmem>>, vector<2x32xf32>
    %cst_11 = arith.constant dense<0.000000e+00> : vector<2x32xf32>
    %12 = tpu.matmul %10, %11, %cst_11 {dimension_numbers = #tpu.dot_dimension_numbers<[1], [0], [0], [1], [0, 0, 1, 1], [], []>} : vector<2x2xf32>, vector<2x32xf32>, vector<2x32xf32> -> vector<2x32xf32>
    %c0_12 = arith.constant 0 : index
    %c0_13 = arith.constant 0 : index
    %13 = vector.load %arg5[%c0_12, %c0_13] : memref<1x32xf32, #tpu.memory_space<vmem>>, vector<1x32xf32>
    %14 = vector.broadcast %13 : vector<1x32xf32> to vector<2x32xf32>
    %15 = arith.addf %12, %14 : vector<2x32xf32>
    %16 = arith.negf %15 : vector<2x32xf32>
    %17 = math.exp %16 : vector<2x32xf32>
    %cst_14 = arith.constant 1.000000e+00 : f32
    %18 = vector.broadcast %cst_14 : f32 to vector<2x32xf32>
    %19 = arith.addf %18, %17 : vector<2x32xf32>
    %20 = arith.divf %18, %19 : vector<2x32xf32>
    %c0_15 = arith.constant 0 : index
    %c0_16 = arith.constant 0 : index
    %c0_17 = arith.constant 0 : index
    %21 = vector.load %arg1[%c0_15, %c0_16, %c0_17] : memref<2x32x196xf32, #tpu.memory_space<vmem>>, vector<2x32x196xf32>
    %22 = vector.shape_cast %20 : vector<2x32xf32> to vector<2x32x1xf32>
    %23 = vector.broadcast %22 : vector<2x32x1xf32> to vector<2x32x196xf32>
    %24 = arith.mulf %21, %23 : vector<2x32x196xf32>
    %c0_18 = arith.constant 0 : index
    %c0_19 = arith.constant 0 : index
    %c0_20 = arith.constant 0 : index
    %25 = vector.load %arg6[%c0_18, %c0_19, %c0_20] : memref<2x32x196xf32, #tpu.memory_space<vmem>>, vector<2x32x196xf32>
    tpu.vector_store %arg6[%c0_18, %c0_19, %c0_20], %24 {strides = array<i32>} : memref<2x32x196xf32, #tpu.memory_space<vmem>>, vector<2x32x196xf32>,
    return
  }
  func.func @transform_0(%arg0: i32) -> (i32, i32, i32) {
    %c0_i32 = arith.constant 0 : i32
    %c0_i32_0 = arith.constant 0 : i32
    %c0_i32_1 = arith.constant 0 : i32
    return %arg0, %c0_i32, %c0_i32_0 : i32, i32, i32
  }
  func.func @transform_1(%arg0: i32) -> (i32, i32) {
    %c0_i32 = arith.constant 0 : i32
    %c0_i32_0 = arith.constant 0 : i32
    %c0_i32_1 = arith.constant 0 : i32
    return %c0_i32, %c0_i32_0 : i32, i32
  }
  func.func @transform_2(%arg0: i32) -> (i32, i32) {
    %c0_i32 = arith.constant 0 : i32
    %c0_i32_0 = arith.constant 0 : i32
    %c0_i32_1 = arith.constant 0 : i32
    return %c0_i32, %c0_i32_0 : i32, i32
  }
  func.func @transform_3(%arg0: i32) -> (i32, i32) {
    %c0_i32 = arith.constant 0 : i32
    %c0_i32_0 = arith.constant 0 : i32
    %c0_i32_1 = arith.constant 0 : i32
    return %c0_i32, %c0_i32_0 : i32, i32
  }
  func.func @transform_4(%arg0: i32) -> (i32, i32) {
    %c0_i32 = arith.constant 0 : i32
    %c0_i32_0 = arith.constant 0 : i32
    %c0_i32_1 = arith.constant 0 : i32
    return %c0_i32, %c0_i32_0 : i32, i32
  }
  func.func @transform_5(%arg0: i32) -> (i32, i32, i32) {
    %c0_i32 = arith.constant 0 : i32
    %c0_i32_0 = arith.constant 0 : i32
    %c0_i32_1 = arith.constant 0 : i32
    return %arg0, %c0_i32, %c0_i32_0 : i32, i32, i32
  }
}

</mosaic_0001>

<llo_original>
// kernel: channel_se_layer.1
$region0: #{channel_se_layer.1}
  #allocation0 [shape = 'u32[]', space=smem, size = 0x4, offset = 0x4, fixed_abs, tag = 'smem constant byte address 0x4 - core index']
  #allocation1 [shape = 'u32[144,128]{1,0:T(1,128)}', space=vmem, size = 0x12000, scoped, tag = 'internal scratch']
  %s0 = inlined_call_operand.vmem [shape: f32[4,32,196], index: 0, kind: input, shape index: {}]
  %s1 = inlined_call_operand.vmem [shape: f32[32,2], index: 1, kind: input, shape index: {}]
  %s2 = inlined_call_operand.vmem [shape: f32[1,2], index: 2, kind: input, shape index: {}]
  %s3 = inlined_call_operand.vmem [shape: f32[2,32], index: 3, kind: input, shape index: {}]
  %s4 = inlined_call_operand.vmem [shape: f32[1,32], index: 4, kind: input, shape index: {}]
  %s5 = inlined_call_operand.vmem [shape: f32[4,32,196], index: 5, kind: output, shape index: {}]
  %s6 = sld [smem:[#allocation0]]
  $region53: #{channel_se_layer.1} parent=0
    _
  %s8 = ssub.s32 1, %s6
  %s9 = scalar_select 0, %s8, %s6
  loop: start=0, step=1, limit=4
  $region2: #{channel_se_layer.1} parent=0 // loop_pre_header
    _
  $region3: #{channel_se_layer.1} parent=0 // loop_header
    %s11 = sphi 0, %s15
    %p12 = scmp.ge.s32.totalorder %s11, 4
    %s21 = sphi 0, %s23
    %s24 = sphi 0, %s21
    %s25 = sphi 0, %s24
    %s41 = sphi 0, %s25
    %s45 = sphi 0, %s45
    %s47 = sphi 0, %s45
    %s48 = sphi 0, %s47
    %s62 = sphi 0, %s48
    %s66 = sphi 0, %s66
    %s68 = sphi 0, %s66
    %s69 = sphi 0, %s68
    %s83 = sphi 0, %s69
    %s87 = sphi 0, %s87
    %s89 = sphi 0, %s87
    %s90 = sphi 0, %s89
    %s104 = sphi 0, %s90
    %s108 = sphi 0, %s108
    %s110 = sphi 0, %s108
    %s111 = sphi 0, %s110
    %s125 = sphi 0, %s111
    %s131 = sphi 0, %s133
    %s134 = sphi 0, %s131
    %s135 = sphi 0, %s134
    %s151 = sphi 0, %s135
  $region4: #{channel_se_layer.1} parent=0 // loop_header_branch
    %14 = sbr.rel (%p12) target = $region8
  $region5: #{channel_se_layer.1} parent=0 // loop_body
    %s16 = ssub.s32 %s11, 1
    %s17 = ssub.s32 %s11, 2
    %s18 = sadd.s32 %s11, 1
    %s19 = ssub.s32 %s11, %s18
    %p20 = scmp.eq.s32.totalorder %s19, 0
    %s22 = sadd.s32 %s21, 1
    %s23 = scalar_select %p20, %s21, %s22
    %p26 = pneg %p20
    %p27 = scmp.eq.s32.totalorder %s11, 1
    %p28 = por %p26, %p27
    %p29 = scmp.ne.s32.totalorder %s21, %s24
    %p30 = scmp.eq.s32.totalorder %s11, 0
    %p31 = por %p29, %p30
    %p32 = scmp.ne.s32.totalorder %s21, %s24
    %p33 = scmp.eq.s32.totalorder %s16, 1
    %p34 = por %p32, %p33
    %p35 = scmp.ne.s32.totalorder %s24, %s25
    %p36 = scmp.eq.s32.totalorder %s16, 0
    %p37 = por %p35, %p36
    %p38 = scmp.ne.s32.totalorder %s24, %s25
    %p39 = scmp.eq.s32.totalorder %s17, 1
    %p40 = por %p38, %p39
    %p42 = scmp.ne.s32.totalorder %s25, %s41
    %p43 = scmp.eq.s32.totalorder %s17, 0
    %p44 = por %p42, %p43
    %s46 = sadd.s32 %s45, 1
    %p49 = scmp.eq.s32.totalorder %s11, 1
    %p50 = scmp.ne.s32.totalorder %s45, %s47
    %p51 = scmp.eq.s32.totalorder %s11, 0
    %p52 = por %p50, %p51
    %p53 = scmp.ne.s32.totalorder %s45, %s47
    %p54 = scmp.eq.s32.totalorder %s16, 1
    %p55 = por %p53, %p54
    %p56 = scmp.ne.s32.totalorder %s47, %s48
    %p57 = scmp.eq.s32.totalorder %s16, 0
    %p58 = por %p56, %p57
    %p59 = scmp.ne.s32.totalorder %s47, %s48
    %p60 = scmp.eq.s32.totalorder %s17, 1
    %p61 = por %p59, %p60
    %p63 = scmp.ne.s32.totalorder %s48, %s62
    %p64 = scmp.eq.s32.totalorder %s17, 0
    %p65 = por %p63, %p64
    %s67 = sadd.s32 %s66, 1
    %p70 = scmp.eq.s32.totalorder %s11, 1
    %p71 = scmp.ne.s32.totalorder %s66, %s68
    %p72 = scmp.eq.s32.totalorder %s11, 0
    %p73 = por %p71, %p72
    %p74 = scmp.ne.s32.totalorder %s66, %s68
    %p75 = scmp.eq.s32.totalorder %s16, 1
    %p76 = por %p74, %p75
    %p77 = scmp.ne.s32.totalorder %s68, %s69
    %p78 = scmp.eq.s32.totalorder %s16, 0
    %p79 = por %p77, %p78
    %p80 = scmp.ne.s32.totalorder %s68, %s69
    %p81 = scmp.eq.s32.totalorder %s17, 1
    %p82 = por %p80, %p81
    %p84 = scmp.ne.s32.totalorder %s69, %s83
    %p85 = scmp.eq.s32.totalorder %s17, 0
    %p86 = por %p84, %p85
    %s88 = sadd.s32 %s87, 1
    %p91 = scmp.eq.s32.totalorder %s11, 1
    %p92 = scmp.ne.s32.totalorder %s87, %s89
    %p93 = scmp.eq.s32.totalorder %s11, 0
    %p94 = por %p92, %p93
    %p95 = scmp.ne.s32.totalorder %s87, %s89
    %p96 = scmp.eq.s32.totalorder %s16, 1
    %p97 = por %p95, %p96
    %p98 = scmp.ne.s32.totalorder %s89, %s90
    %p99 = scmp.eq.s32.totalorder %s16, 0
    %p100 = por %p98, %p99
    %p101 = scmp.ne.s32.totalorder %s89, %s90
    %p102 = scmp.eq.s32.totalorder %s17, 1
    %p103 = por %p101, %p102
    %p105 = scmp.ne.s32.totalorder %s90, %s104
    %p106 = scmp.eq.s32.totalorder %s17, 0
    %p107 = por %p105, %p106
    %s109 = sadd.s32 %s108, 1
    %p112 = scmp.eq.s32.totalorder %s11, 1
    %p113 = scmp.ne.s32.totalorder %s108, %s110
    %p114 = scmp.eq.s32.totalorder %s11, 0
    %p115 = por %p113, %p114
    %p116 = scmp.ne.s32.totalorder %s108, %s110
    %p117 = scmp.eq.s32.totalorder %s16, 1
    %p118 = por %p116, %p117
    %p119 = scmp.ne.s32.totalorder %s110, %s111
    %p120 = scmp.eq.s32.totalorder %s16, 0
    %p121 = por %p119, %p120
    %p122 = scmp.ne.s32.totalorder %s110, %s111
    %p123 = scmp.eq.s32.totalorder %s17, 1
    %p124 = por %p122, %p123
    %p126 = scmp.ne.s32.totalorder %s111, %s125
    %p127 = scmp.eq.s32.totalorder %s17, 0
    %p128 = por %p126, %p127
    %s129 = ssub.s32 %s11, %s18
    %p130 = scmp.eq.s32.totalorder %s129, 0
    %s132 = sadd.s32 %s131, 1
    %s133 = scalar_select %p130, %s131, %s132
    %p136 = pneg %p130
    %p137 = scmp.eq.s32.totalorder %s11, 1
    %p138 = por %p136, %p137
    %p139 = scmp.ne.s32.totalorder %s131, %s134
    %p140 = scmp.eq.s32.totalorder %s11, 0
    %p141 = por %p139, %p140
    %p142 = scmp.ne.s32.totalorder %s131, %s134
    %p143 = scmp.eq.s32.totalorder %s16, 1
    %p144 = por %p142, %p143
    %p145 = scmp.ne.s32.totalorder %s134, %s135
    %p146 = scmp.eq.s32.totalorder %s16, 0
    %p147 = por %p145, %p146
    %p148 = scmp.ne.s32.totalorder %s134, %s135
    %p149 = scmp.eq.s32.totalorder %s17, 1
    %p150 = por %p148, %p149
    %p152 = scmp.ne.s32.totalorder %s135, %s151
    %p153 = scmp.eq.s32.totalorder %s17, 0
    %p154 = por %p152, %p153
    %p155 = scmp.le.s32.totalorder 1, %s11
    %p156 = scmp.lt.s32.totalorder %s11, 3
    %p157 = pnand %p155, %p156
    %p158 = pneg %p157
    // Predicated region
    $region9: #{channel_se_layer.1} parent=5 // pred_check
      _
    $region10: #{channel_se_layer.1} parent=5 // pred_check_branch
      %160 = sbr.rel (%p157) target = $region12
    $region11: #{channel_se_layer.1} parent=5 // pred_region
      %s161 = ssub.s32 %s11, 1
      // Predicated region
      $region13: #{channel_se_layer.1} parent=11 // pred_check
        %p162 = pneg %p58
      $region14: #{channel_se_layer.1} parent=11 // pred_check_branch
        %164 = sbr.rel (%p162) target = $region16
      $region15: #{channel_se_layer.1} parent=11 // pred_region
        _
      $region16: #{channel_se_layer.1} parent=11 // pred_fallthru
        _
      // Predicated region
      $region17: #{channel_se_layer.1} parent=11 // pred_check
        %p165 = pneg %p79
      $region18: #{channel_se_layer.1} parent=11 // pred_check_branch
        %167 = sbr.rel (%p165) target = $region20
      $region19: #{channel_se_layer.1} parent=11 // pred_region
        _
      $region20: #{channel_se_layer.1} parent=11 // pred_fallthru
        _
      // Predicated region
      $region21: #{channel_se_layer.1} parent=11 // pred_check
        %p168 = pneg %p100
      $region22: #{channel_se_layer.1} parent=11 // pred_check_branch
        %170 = sbr.rel (%p168) target = $region24
      $region23: #{channel_se_layer.1} parent=11 // pred_region
        _
      $region24: #{channel_se_layer.1} parent=11 // pred_fallthru
        _
      // Predicated region
      $region25: #{channel_se_layer.1} parent=11 // pred_check
        %p171 = pneg %p121
      $region26: #{channel_se_layer.1} parent=11 // pred_check_branch
        %173 = sbr.rel (%p171) target = $region28
      $region27: #{channel_se_layer.1} parent=11 // pred_region
        _
      $region28: #{channel_se_layer.1} parent=11 // pred_fallthru
        _
    $region12: #{channel_se_layer.1} parent=5 // pred_fallthru
      _
    %p174 = scmp.lt.s32.totalorder %s11, 2
    // Predicated region
    $region29: #{channel_se_layer.1} parent=5 // pred_check
      %p175 = pneg %p174
    $region30: #{channel_se_layer.1} parent=5 // pred_check_branch
      %177 = sbr.rel (%p175) target = $region32
    $region31: #{channel_se_layer.1} parent=5 // pred_region
      // Predicated region
      $region33: #{channel_se_layer.1} parent=31 // pred_check
        %p178 = pneg %p31
      $region34: #{channel_se_layer.1} parent=31 // pred_check_branch
        %180 = sbr.rel (%p178) target = $region36
      $region35: #{channel_se_layer.1} parent=31 // pred_region
        %s181 = smul.u32 2, %s11
        %p182 = scmp.lt.s32.totalorder %s181, 3
        %s183 = scalar_select %p182, %s181, 3
        %s184 = smul.addr %s183, 8
        %s185 = smul.addr %s184, 8
        %s186 = scalar_lea.vmem %s0, %s185
        %s187 = smul.u32 2, %s11
      $region36: #{channel_se_layer.1} parent=31 // pred_fallthru
        _
    $region32: #{channel_se_layer.1} parent=5 // pred_fallthru
      _
    %p188 = scmp.le.s32.totalorder 1, %s11
    %p189 = scmp.lt.s32.totalorder %s11, 3
    %p190 = pnand %p188, %p189
    %p191 = pneg %p190
    // Predicated region
    $region37: #{channel_se_layer.1} parent=5 // pred_check
      _
    $region38: #{channel_se_layer.1} parent=5 // pred_check_branch
      %193 = sbr.rel (%p190) target = $region40
    $region39: #{channel_se_layer.1} parent=5 // pred_region
      %s194 = ssub.s32 %s11, 1
      %s195 = smul.u32 2, %s16
      %p196 = scmp.lt.s32.totalorder %s195, 3
      %s197 = scalar_select %p196, %s195, 3
      %s198 = smul.addr %s197, 8
      %s199 = smul.addr %s198, 8
      %s200 = scalar_lea.vmem %s0, %s199
      %p201 = pneg %p37
      %p202 = pneg %p34
      %p203 = pneg %p58
      %p204 = pneg %p55
      %p205 = pneg %p79
      %p206 = pneg %p76
      %p207 = pneg %p100
      %p208 = pneg %p97
      %p209 = pneg %p121
      %p210 = pneg %p118
      %p211 = pneg %p147
      %p212 = pneg %p144
      %s213 = smul.u32 2, %s16
      %p214 = scmp.lt.s32.totalorder %s213, 3
      %s215 = scalar_select %p214, %s213, 3
      %s216 = smul.addr %s215, 8
      %s217 = smul.addr %s216, 8
      %s218 = scalar_lea.vmem %s5, %s217
      %s219 = smul.u32 2, %s16
      %p220 = scmp.lt.s32.totalorder %s219, 3
      %s221 = scalar_select %p220, %s219, 3
      %s222 = smul.addr %s221, 8
      %s223 = smul.addr %s222, 8
      %s224 = scalar_lea.vmem %s0, %s223
      %s225 = smul.u32 2, %s16
      %s226 = smul.u32 2, %s16
      %p227 = scmp.lt.s32.totalorder %s226, 3
      %s228 = scalar_select %p227, %s226, 3
      %s229 = smul.addr %s228, 8
      %s230 = smul.addr %s229, 8
      %s231 = scalar_lea.vmem %s5, %s230
      %s232 = smul.u32 2, %s16
      %v233 = vld [vmem:[%s224] sm:$0xff]
      %v234 = vld [vmem:[%s224 + $0x8] sm:$0xff]
      %v235 = vld [vmem:[%s224 + $0x10] sm:$0xff]
      %v236 = vld [vmem:[%s224 + $0x18] sm:$0xff]
      %v237 = vld [vmem:[%s224 + $0x20] sm:$0xff]
      %v238 = vld [vmem:[%s224 + $0x28] sm:$0xff]
      %v239 = vld [vmem:[%s224 + $0x30] sm:$0xff]
      %v240 = vld [vmem:[%s224 + $0x38] sm:$0xff]
      %v241 = vld [vmem:[%s224 + $0x40] sm:$0xff]
      %v242 = vld [vmem:[%s224 + $0x48] sm:$0xff]
      %v243 = vld [vmem:[%s224 + $0x50] sm:$0xff]
      %v244 = vld [vmem:[%s224 + $0x58] sm:$0xff]
      %v245 = vld [vmem:[%s224 + $0x60] sm:$0xff]
      %v246 = vld [vmem:[%s224 + $0x68] sm:$0xff]
      %v247 = vld [vmem:[%s224 + $0x70] sm:$0xff]
      %v248 = vld [vmem:[%s224 + $0x78] sm:$0xff]
      %vm249 = vcmask 556032
      %v250 = vsel %vm249, %v234, 0.0
      %v251 = vadd.f32 %v233, %v250
      %252 = vadd.xlane.f32.xlu0 %v251
      %v253 = vpop.xlane.xlu0 %252
      %v254 = vsel %vm249, %v236, 0.0
      %v255 = vadd.f32 %v235, %v254
      %256 = vadd.xlane.f32.xlu0 %v255
      %v257 = vpop.xlane.xlu0 %256
      %v258 = vsel %vm249, %v238, 0.0
      %v259 = vadd.f32 %v237, %v258
      %260 = vadd.xlane.f32.xlu0 %v259
      %v261 = vpop.xlane.xlu0 %260
      %v262 = vsel %vm249, %v240, 0.0
      %v263 = vadd.f32 %v239, %v262
      %264 = vadd.xlane.f32.xlu0 %v263
      %v265 = vpop.xlane.xlu0 %264
      %v266 = vsel %vm249, %v242, 0.0
      %v267 = vadd.f32 %v241, %v266
      %268 = vadd.xlane.f32.xlu0 %v267
      %v269 = vpop.xlane.xlu0 %268
      %v270 = vsel %vm249, %v244, 0.0
      %v271 = vadd.f32 %v243, %v270
      %272 = vadd.xlane.f32.xlu0 %v271
      %v273 = vpop.xlane.xlu0 %272
      %v274 = vsel %vm249, %v246, 0.0
      %v275 = vadd.f32 %v245, %v274
      %276 = vadd.xlane.f32.xlu0 %v275
      %v277 = vpop.xlane.xlu0 %276
      %v278 = vsel %vm249, %v248, 0.0
      %v279 = vadd.f32 %v247, %v278
      %280 = vadd.xlane.f32.xlu0 %v279
      %v281 = vpop.xlane.xlu0 %280
      %v282 = vmul.f32 %v253, 0.0051020407
      %v283 = vmul.f32 %v257, 0.0051020407
      %v284 = vmul.f32 %v261, 0.0051020407
      %v285 = vmul.f32 %v265, 0.0051020407
      %v286 = vmul.f32 %v269, 0.0051020407
      %v287 = vmul.f32 %v273, 0.0051020407
      %v288 = vmul.f32 %v277, 0.0051020407
      %v289 = vmul.f32 %v281, 0.0051020407
      %v290 = vld [vmem:[%s1] sm:$0xff]
      %v291 = vld [vmem:[%s1 + $0x8] sm:$0xff]
      %v292 = vld [vmem:[%s1 + $0x10] sm:$0xff]
      %v293 = vld [vmem:[%s1 + $0x18] sm:$0xff]
      %v294 = vld [vmem:[%s2] sm:$0x1]
      %v296 = vlaneseq
      %v297 = vshrl.u32 %v296, 7
      %v298 = vsub.s32 0, %v297
      %v299 = vrot.slane %v294, %v298
      %v309 = vlaneseq
      %v310 = vand.u32 %v309, 127
      %v311 = vlaneseq
      %v312 = vshrl.u32 %v311, 7
      %v313 = vsub.s32 %v310, %v312
      %v314 = vrot.slane %v282, %v313
      %v315 = vadd.s32 %v310, 4294967288
      %v316 = vlaneseq
      %v317 = vshrl.u32 %v316, 7
      %v318 = vsub.s32 %v315, %v317
      %v319 = vrot.slane %v283, %v318
      %vm320 = vcmask 130112
      %v321 = vsel %vm320, %v319, %v314
      %v322 = vadd.s32 %v310, 4294967280
      %v323 = vlaneseq
      %v324 = vshrl.u32 %v323, 7
      %v325 = vsub.s32 %v322, %v324
      %v326 = vrot.slane %v284, %v325
      %vm327 = vcmask 195712
      %v328 = vsel %vm327, %v326, %v321
      %v329 = vadd.s32 %v310, 4294967272
      %v330 = vlaneseq
      %v331 = vshrl.u32 %v330, 7
      %v332 = vsub.s32 %v329, %v331
      %v333 = vrot.slane %v285, %v332
      %vm334 = vcmask 261312
      %v335 = vsel %vm334, %v333, %v328
      %v336 = vlaneseq
      %v337 = vshrl.u32 %v336, 7
      %v338 = vsub.s32 %v310, %v337
      %v339 = vrot.slane %v286, %v338
      %v340 = vlaneseq
      %v341 = vshrl.u32 %v340, 7
      %v342 = vsub.s32 %v315, %v341
      %v343 = vrot.slane %v287, %v342
      %v344 = vsel %vm320, %v343, %v339
      %v345 = vlaneseq
      %v346 = vshrl.u32 %v345, 7
      %v347 = vsub.s32 %v322, %v346
      %v348 = vrot.slane %v288, %v347
      %v349 = vsel %vm327, %v348, %v344
      %v350 = vlaneseq
      %v351 = vshrl.u32 %v350, 7
      %v352 = vsub.s32 %v329, %v351
      %v353 = vrot.slane %v289, %v352
      %v354 = vsel %vm334, %v353, %v349
      %vm355 = vcmask 1041409
      %v356 = vsel %vm355, %v354, %v335
      %vm357 = vcmask 261120
      %v358 = vsel %vm357, %v356, 0
      %360 = vmatprep.subr.mxu0 0.0
      %361 = vmatpush1.msra.mxu0 %v290
      %362 = vmatprep.subr.mxu0 0.0
      %363 = vmatpush1.msra.mxu0 %v291
      %364 = vmatprep.subr.mxu0 0.0
      %365 = vmatpush1.msra.mxu0 %v292
      %366 = vmatprep.subr.mxu0 0.0
      %367 = vmatpush1.msra.mxu0 %v293
      %368 = vmatprep.subr.mxu0 0.0
      %369 = vmatpush1.msra.mxu0 0.0
      %370 = vmatprep.subr.mxu0 0.0
      %371 = vmatpush1.msra.mxu0 0.0
      %372 = vmatprep.subr.mxu0 0.0
      %373 = vmatpush1.msra.mxu0 0.0
      %374 = vmatprep.subr.mxu0 0.0
      %375 = vmatpush1.msra.mxu0 0.0
      %376 = vmatprep.subr.mxu0 0.0
      %377 = vmatpush1.msra.mxu0 0.0
      %378 = vmatprep.subr.mxu0 0.0
      %379 = vmatpush1.msra.mxu0 0.0
      %380 = vmatprep.subr.mxu0 0.0
      %381 = vmatpush1.msra.mxu0 0.0
      %382 = vmatprep.subr.mxu0 0.0
      %383 = vmatpush1.msra.mxu0 0.0
      %384 = vmatprep.subr.mxu0 0.0
      %385 = vmatpush1.msra.mxu0 0.0
      %386 = vmatprep.subr.mxu0 0.0
      %387 = vmatpush1.msra.mxu0 0.0
      %388 = vmatprep.subr.mxu0 0.0
      %389 = vmatpush1.msra.mxu0 0.0
      %390 = vmatprep.subr.mxu0 0.0
      %391 = vmatpush1.msra.mxu0 0.0
      %392 = vmatprep.subr.mxu0 0.0
      %393 = vmatpush1.msra.mxu0 0.0
      %394 = vmatprep.subr.mxu0 0.0
      %395 = vmatpush1.msra.mxu0 0.0
      %396 = vmatprep.subr.mxu0 0.0
      %397 = vmatpush1.msra.mxu0 0.0
      %398 = vmatprep.subr.mxu0 0.0
      %399 = vmatpush1.msra.mxu0 0.0
      %400 = vmatprep.subr.mxu0 0.0
      %401 = vmatpush1.msra.mxu0 0.0
      %402 = vmatprep.subr.mxu0 0.0
      %403 = vmatpush1.msra.mxu0 0.0
      %404 = vmatprep.subr.mxu0 0.0
      %405 = vmatpush1.msra.mxu0 0.0
      %406 = vmatprep.subr.mxu0 0.0
      %407 = vmatpush1.msra.mxu0 0.0
      %408 = vmatprep.subr.mxu0 0.0
      %409 = vmatpush1.msra.mxu0 0.0
      %410 = vmatprep.subr.mxu0 0.0
      %411 = vmatpush1.msra.mxu0 0.0
      %412 = vmatprep.subr.mxu0 0.0
      %413 = vmatpush1.msra.mxu0 0.0
      %414 = vmatprep.subr.mxu0 0.0
      %415 = vmatpush1.msra.mxu0 0.0
      %416 = vmatprep.subr.mxu0 0.0
      %417 = vmatpush1.msra.mxu0 0.0
      %418 = vmatprep.subr.mxu0 0.0
      %419 = vmatpush1.msra.mxu0 0.0
      %420 = vmatprep.subr.mxu0 0.0
      %421 = vmatpush1.msra.mxu0 0.0
      %422 = vmatprep.subr.mxu0 0.0
      %423 = vmatpush1.msra.mxu0 0.0
      %424 = vmatprep.mubr.f32.mxu0 0.0
      %425 = vmatmul.mubr.f32.gmra.mrb[0].mxu0 %v358
      %v426 = vpop.f32.mrb[0].mxu0
      %v427 = vadd.f32 %v299, %v426
      %v428 = vpop.f32.mrb[0].mxu0
      %429 = vdwg.mxu0
      %v430 = vmax.f32 %v427, 0.0
      %v431 = vld [vmem:[%s3] sm:$0x3]
      %v432 = vld [vmem:[%s4] sm:$0x1]
      %v434 = vlaneseq
      %v435 = vshrl.u32 %v434, 7
      %v436 = vsub.s32 0, %v435
      %v437 = vrot.slane %v432, %v436
      %vm439 = vcmask 15360
      %v441 = vsel %vm439, %v430, 0
      %vm443 = vcmask 1041408
      %v445 = vsel %vm443, %v431, 0
      %447 = vmatprep.subr.mxu0 0.0
      %448 = vmatpush1.msra.mxu0 %v445
      %449 = vmatprep.subr.mxu0 0.0
      %450 = vmatpush1.msra.mxu0 0.0
      %451 = vmatprep.subr.mxu0 0.0
      %452 = vmatpush1.msra.mxu0 0.0
      %453 = vmatprep.subr.mxu0 0.0
      %454 = vmatpush1.msra.mxu0 0.0
      %455 = vmatprep.subr.mxu0 0.0
      %456 = vmatpush1.msra.mxu0 0.0
      %457 = vmatprep.subr.mxu0 0.0
      %458 = vmatpush1.msra.mxu0 0.0
      %459 = vmatprep.subr.mxu0 0.0
      %460 = vmatpush1.msra.mxu0 0.0
      %461 = vmatprep.subr.mxu0 0.0
      %462 = vmatpush1.msra.mxu0 0.0
      %463 = vmatprep.subr.mxu0 0.0
      %464 = vmatpush1.msra.mxu0 0.0
      %465 = vmatprep.subr.mxu0 0.0
      %466 = vmatpush1.msra.mxu0 0.0
      %467 = vmatprep.subr.mxu0 0.0
      %468 = vmatpush1.msra.mxu0 0.0
      %469 = vmatprep.subr.mxu0 0.0
      %470 = vmatpush1.msra.mxu0 0.0
      %471 = vmatprep.subr.mxu0 0.0
      %472 = vmatpush1.msra.mxu0 0.0
      %473 = vmatprep.subr.mxu0 0.0
      %474 = vmatpush1.msra.mxu0 0.0
      %475 = vmatprep.subr.mxu0 0.0
      %476 = vmatpush1.msra.mxu0 0.0
      %477 = vmatprep.subr.mxu0 0.0
      %478 = vmatpush1.msra.mxu0 0.0
      %479 = vmatprep.subr.mxu0 0.0
      %480 = vmatpush1.msra.mxu0 0.0
      %481 = vmatprep.subr.mxu0 0.0
      %482 = vmatpush1.msra.mxu0 0.0
      %483 = vmatprep.subr.mxu0 0.0
      %484 = vmatpush1.msra.mxu0 0.0
      %485 = vmatprep.subr.mxu0 0.0
      %486 = vmatpush1.msra.mxu0 0.0
      %487 = vmatprep.subr.mxu0 0.0
      %488 = vmatpush1.msra.mxu0 0.0
      %489 = vmatprep.subr.mxu0 0.0
      %490 = vmatpush1.msra.mxu0 0.0
      %491 = vmatprep.subr.mxu0 0.0
      %492 = vmatpush1.msra.mxu0 0.0
      %493 = vmatprep.subr.mxu0 0.0
      %494 = vmatpush1.msra.mxu0 0.0
      %495 = vmatprep.subr.mxu0 0.0
      %496 = vmatpush1.msra.mxu0 0.0
      %497 = vmatprep.subr.mxu0 0.0
      %498 = vmatpush1.msra.mxu0 0.0
      %499 = vmatprep.subr.mxu0 0.0
      %500 = vmatpush1.msra.mxu0 0.0
      %501 = vmatprep.subr.mxu0 0.0
      %502 = vmatpush1.msra.mxu0 0.0
      %503 = vmatprep.subr.mxu0 0.0
      %504 = vmatpush1.msra.mxu0 0.0
      %505 = vmatprep.subr.mxu0 0.0
      %506 = vmatpush1.msra.mxu0 0.0
      %507 = vmatprep.subr.mxu0 0.0
      %508 = vmatpush1.msra.mxu0 0.0
      %509 = vmatprep.subr.mxu0 0.0
      %510 = vmatpush1.msra.mxu0 0.0
      %511 = vmatprep.mubr.f32.mxu0 0.0
      %512 = vmatmul.mubr.f32.gmra.mrb[0].mxu0 %v441
      %v513 = vpop.f32.mrb[0].mxu0
      %v514 = vadd.f32 %v437, %v513
      %v515 = vpop.f32.mrb[0].mxu0
      %516 = vdwg.mxu0
      %v517 = vxor.u32 %v514, 2147483648
      %v518 = vmul.f32 %v517, 1.442695
      %v519 = vpow.pop %v518
      %v520 = vadd.f32 %v519, 1.0
      %v521 = vrcp.pop %v520
      %v522 = vmul.f32 1.0, %v521
      %v523 = vlaneseq
      %v524 = vshrl.u32 %v523, 7
      %v525 = vsub.s32 0, %v524
      %v526 = vrot.slane %v522, %v525
      %528 = vbcast.lane.b32.xlu0 %v526, 256
      %v529 = vpop.permute.xlu0 %528
      %s531 = sor.u32 256, 8
      %532 = vbcast.lane.b32.xlu0 %v526, %s531
      %v533 = vpop.permute.xlu0 %532
      %s535 = sor.u32 256, 16
      %536 = vbcast.lane.b32.xlu0 %v526, %s535
      %v537 = vpop.permute.xlu0 %536
      %s539 = sor.u32 256, 24
      %540 = vbcast.lane.b32.xlu0 %v526, %s539
      %v541 = vpop.permute.xlu0 %540
      %v542 = vlaneseq
      %v543 = vshrl.u32 %v542, 7
      %v544 = vsub.s32 1, %v543
      %v545 = vrot.slane %v522, %v544
      %547 = vbcast.lane.b32.xlu0 %v545, 256
      %v548 = vpop.permute.xlu0 %547
      %s550 = sor.u32 256, 8
      %551 = vbcast.lane.b32.xlu0 %v545, %s550
      %v552 = vpop.permute.xlu0 %551
      %s554 = sor.u32 256, 16
      %555 = vbcast.lane.b32.xlu0 %v545, %s554
      %v556 = vpop.permute.xlu0 %555
      %s558 = sor.u32 256, 24
      %559 = vbcast.lane.b32.xlu0 %v545, %s558
      %v560 = vpop.permute.xlu0 %559
      %v561 = vmul.f32 %v233, %v529
      %v562 = vmul.f32 %v234, %v529
      %v563 = vmul.f32 %v235, %v533
      %v564 = vmul.f32 %v236, %v533
      %v565 = vmul.f32 %v237, %v537
      %v566 = vmul.f32 %v238, %v537
      %v567 = vmul.f32 %v239, %v541
      %v568 = vmul.f32 %v240, %v541
      %v569 = vmul.f32 %v241, %v548
      %v570 = vmul.f32 %v242, %v548
      %v571 = vmul.f32 %v243, %v552
      %v572 = vmul.f32 %v244, %v552
      %v573 = vmul.f32 %v245, %v556
      %v574 = vmul.f32 %v246, %v556
      %v575 = vmul.f32 %v247, %v560
      %v576 = vmul.f32 %v248, %v560
      %577 = vst [vmem:[%s231] sm:$0xff] %v561
      %578 = vst.msk [vmem:[%s231 + $0x8] sm:$0xff] %vm249, %v562
      %579 = vst [vmem:[%s231 + $0x10] sm:$0xff] %v563
      %580 = vst.msk [vmem:[%s231 + $0x18] sm:$0xff] %vm249, %v564
      %581 = vst [vmem:[%s231 + $0x20] sm:$0xff] %v565
      %582 = vst.msk [vmem:[%s231 + $0x28] sm:$0xff] %vm249, %v566
      %583 = vst [vmem:[%s231 + $0x30] sm:$0xff] %v567
      %584 = vst.msk [vmem:[%s231 + $0x38] sm:$0xff] %vm249, %v568
      %585 = vst [vmem:[%s231 + $0x40] sm:$0xff] %v569
      %586 = vst.msk [vmem:[%s231 + $0x48] sm:$0xff] %vm249, %v570
      %587 = vst [vmem:[%s231 + $0x50] sm:$0xff] %v571
      %588 = vst.msk [vmem:[%s231 + $0x58] sm:$0xff] %vm249, %v572
      %589 = vst [vmem:[%s231 + $0x60] sm:$0xff] %v573
      %590 = vst.msk [vmem:[%s231 + $0x68] sm:$0xff] %vm249, %v574
      %591 = vst [vmem:[%s231 + $0x70] sm:$0xff] %v575
      %592 = vst.msk [vmem:[%s231 + $0x78] sm:$0xff] %vm249, %v576
      %s593 = smul.u32 2, %s16
      %p594 = scmp.lt.s32.totalorder %s593, 3
      %s595 = scalar_select %p594, %s593, 3
      %s596 = smul.addr %s595, 8
      %s597 = smul.addr %s596, 8
      %s598 = scalar_lea.vmem %s5, %s597
      // Predicated region
      $region41: #{channel_se_layer.1} parent=39 // pred_check
        %p599 = pneg %p144
      $region42: #{channel_se_layer.1} parent=39 // pred_check_branch
        %601 = sbr.rel (%p599) target = $region44
      $region43: #{channel_se_layer.1} parent=39 // pred_region
        %s602 = smul.u32 2, %s16
      $region44: #{channel_se_layer.1} parent=39 // pred_fallthru
        _
    $region40: #{channel_se_layer.1} parent=5 // pred_fallthru
      _
    %p603 = scmp.le.s32.totalorder 2, %s11
    // Predicated region
    $region45: #{channel_se_layer.1} parent=5 // pred_check
      %p604 = pneg %p603
    $region46: #{channel_se_layer.1} parent=5 // pred_check_branch
      %606 = sbr.rel (%p604) target = $region48
    $region47: #{channel_se_layer.1} parent=5 // pred_region
      %s607 = ssub.s32 %s11, 2
      // Predicated region
      $region49: #{channel_se_layer.1} parent=47 // pred_check
        %p608 = pneg %p150
      $region50: #{channel_se_layer.1} parent=47 // pred_check_branch
        %610 = sbr.rel (%p608) target = $region52
      $region51: #{channel_se_layer.1} parent=47 // pred_region
        %s611 = smul.u32 2, %s17
        %p612 = scmp.lt.s32.totalorder %s611, 3
        %s613 = scalar_select %p612, %s611, 3
        %s614 = smul.addr %s613, 8
        %s615 = smul.addr %s614, 8
        %s616 = scalar_lea.vmem %s5, %s615
      $region52: #{channel_se_layer.1} parent=47 // pred_fallthru
        _
    $region48: #{channel_se_layer.1} parent=5 // pred_fallthru
      _
  $region6: #{channel_se_layer.1} parent=0 // loop_footer
    %s15 = sadd.s32 1, %s11
  $region7: #{channel_se_layer.1} parent=0 // loop_footer_branch
    %10 = sbr.rel target = $region3
  $region8: #{channel_se_layer.1} parent=0 // loop_exit
    _

</llo_original>
